<compile_context>
chip_gen: v6e
topology: v6e:2x2x1
jax: 0.10.0
libtpu: 0.0.40
codegen_flags: <defaults>
</compile_context>

<pallas_src>
import math
import functools

import jax
import jax.numpy as jnp
from jax.experimental import pallas as pl
from jax.experimental.pallas import tpu as pltpu


def make_positional_encoding_table(d_model: int, max_len: int = 5000) -> jnp.ndarray:
    """Sinusoidal table identical to the PyTorch __init__ buffer, shape (max_len, d_model)."""
    assert d_model % 2 == 0, "d_model must be even (matches the torch module)"
    position = jnp.arange(0, max_len, dtype=jnp.float32)[:, None]                # (max_len, 1)
    div_term = jnp.exp(
        jnp.arange(0, d_model, 2, dtype=jnp.float32) * (-math.log(10000.0) / d_model)
    )                                                                            # (d_model/2,)
    angles = position * div_term                                                 # (max_len, d/2)
    pe = jnp.zeros((max_len, d_model), dtype=jnp.float32)
    pe = pe.at[:, 0::2].set(jnp.sin(angles))
    pe = pe.at[:, 1::2].set(jnp.cos(angles))
    return pe


# ------------------------- stateless in-kernel hash ------------------------- #
# splitmix32-style finalizer, expressed entirely in int32 (bit-identical to the
# uint32 version because two's-complement mul/xor/logical-shift wrap mod 2^32).
_GOLDEN = 0x9E3779B9 - (1 << 32)     # -1640531527
_MIX1 = 0x7FEB352D                   #  2146121773
_MIX2 = 0x846CA68B - (1 << 32)       # -2073254261


def _mix32(h):
    h = h ^ jax.lax.shift_right_logical(h, 16)
    h = h * jnp.int32(_MIX1)
    h = h ^ jax.lax.shift_right_logical(h, 15)
    h = h * jnp.int32(_MIX2)
    h = h ^ jax.lax.shift_right_logical(h, 16)
    return h


# ----------------------------- Pallas kernels ------------------------------- #

def _pe_broadcast(pe_tile, batch):
    # (tS, D) -> (tS, B*D): repeat along the lane axis so it matches the
    # lane-dense x tile.  Lane-axis concatenate is cheap (XLU) and avoids any
    # extra HBM traffic for a pre-tiled pe table.
    if batch == 1:
        return pe_tile
    return jnp.concatenate([pe_tile] * batch, axis=-1)


def _pe_add_kernel(x_ref, pe_ref, o_ref, *, batch):
    # x_ref/o_ref: (tS, B*D), pe_ref: (tS, D)
    o_ref[...] = (x_ref[...] + _pe_broadcast(pe_ref[...], batch)).astype(o_ref.dtype)


def _pe_add_dropout_kernel(seed_ref, x_ref, pe_ref, o_ref, *, batch, rate):
    # Training path: add PE, then inverted dropout with a stateless hash keyed
    # on (seed, global element index) -> independent mask per tile, invariant
    # to the tile size chosen.
    # TODO(synk): PRNG stream differs from torch's nn.Dropout, so masks are not
    # bit-identical; caller must vary `seed` per training step.
    t_rows, width = x_ref.shape
    y = x_ref[...] + _pe_broadcast(pe_ref[...], batch)

    row0 = pl.program_id(0) * t_rows
    row = jax.lax.broadcasted_iota(jnp.int32, (t_rows, width), 0) + row0
    col = jax.lax.broadcasted_iota(jnp.int32, (t_rows, width), 1)
    h = row * jnp.int32(width) + col                      # global element index
    h = h + seed_ref[0] * jnp.int32(_GOLDEN)
    h = _mix32(h)

    u31 = h & jnp.int32(0x7FFFFFFF)                       # uniform in [0, 2^31)
    thresh = min(max(int(rate * float(1 << 31)), 0), (1 << 31) - 1)
    keep = u31 >= jnp.int32(thresh)                       # integer-threshold compare
    scale = jnp.float32(1.0 / (1.0 - rate))
    o_ref[...] = (jnp.where(keep, y, jnp.float32(0.0)) * scale).astype(o_ref.dtype)


# --------------------------------- Wrapper ----------------------------------- #

@functools.partial(jax.jit, static_argnames=("dropout_rate", "training"))
def positional_encoding_forward(
    x: jnp.ndarray,          # (seq_len, batch, d_model)
    pe: jnp.ndarray,         # (max_len, d_model)
    seed: jnp.ndarray,       # () int32, used only when training=True
    *,
    dropout_rate: float = 0.1,
    training: bool = False,
) -> jnp.ndarray:
    seq_len, batch, d_model = x.shape
    max_len, pe_d = pe.shape
    assert pe_d == d_model and seq_len <= max_len
    width = batch * d_model
    itemsize = jnp.dtype(x.dtype).itemsize

    # Lane-dense view: fuse batch into the last (lane) axis.  Free reshape.
    x2 = x.reshape(seq_len, width)

    # Row-tile the sequence axis: target ~2 MiB per x tile so double-buffered
    # x + out tiles (~4x tile bytes) fit comfortably in scoped VMEM on all of
    # v5e (16 MiB) / v6e (32 MiB) / v7x (32 MiB scoped of 64 MiB physical).
    target_tile_bytes = 2 * 1024 * 1024
    rows = max(8, target_tile_bytes // max(1, width * itemsize))
    row_tile = seq_len if rows >= seq_len else max(8, (rows // 8) * 8)
    n_blocks = pl.cdiv(seq_len, row_tile)

    # Keep the pe BlockSpec legal if row_tile is not a multiple of 8
    # (only possible when row_tile == seq_len): make the block the full array.
    pe_in = pe if row_tile % 8 == 0 else pe[:seq_len]

    x_spec = pl.BlockSpec((row_tile, width), lambda i: (i, 0))
    pe_spec = pl.BlockSpec((row_tile, d_model), lambda i: (i, 0))
    o_spec = pl.BlockSpec((row_tile, width), lambda i: (i, 0))
    out_shape = jax.ShapeDtypeStruct((seq_len, width), x.dtype)
    cparams = pltpu.CompilerParams(dimension_semantics=("parallel",))

    if (not training) or dropout_rate == 0.0:
        # Eval-mode forward: dropout is identity (matches nn.Dropout.eval()).
        out2 = pl.pallas_call(
            functools.partial(_pe_add_kernel, batch=batch),
            out_shape=out_shape,
            grid=(n_blocks,),
            in_specs=[x_spec, pe_spec],
            out_specs=o_spec,
            compiler_params=cparams,
        )(x2, pe_in)
        return out2.reshape(seq_len, batch, d_model)

    assert 0.0 < dropout_rate < 1.0
    seed_arr = jnp.asarray(seed, dtype=jnp.int32).reshape((1,))
    out2 = pl.pallas_call(
        functools.partial(_pe_add_dropout_kernel, batch=batch, rate=float(dropout_rate)),
        out_shape=out_shape,
        grid=(n_blocks,),
        in_specs=[pl.BlockSpec(memory_space=pltpu.SMEM), x_spec, pe_spec],
        out_specs=o_spec,
        compiler_params=cparams,
    )(seed_arr, x2, pe_in)
    return out2.reshape(seq_len, batch, d_model)


# ----------------------------------- Main ------------------------------------ #

if __name__ == "__main__":
    d_model = 32
    max_len = 5000
    seq_len = 8
    batch = 2
    rate = 0.1

    key = jax.random.PRNGKey(0)
    x = jax.random.normal(key, (seq_len, batch, d_model), dtype=jnp.float32)
    pe = make_positional_encoding_table(d_model, max_len)
    seed = jnp.int32(0)

    # Eval-mode forward (dropout = identity), matching module.eval() semantics.
    out = positional_encoding_forward(x, pe, seed, dropout_rate=rate, training=False)
    out = jax.block_until_ready(out)

    ref = x + pe[:seq_len][:, None, :]
    assert out.shape == x.shape
    assert jnp.allclose(out, ref, atol=1e-6, rtol=1e-6), "mismatch vs reference"

    # Training-mode forward: every output element must be either 0 (dropped) or
    # the PE-added input scaled by 1/(1-rate).
    out_train = positional_encoding_forward(x, pe, seed, dropout_rate=rate, training=True)
    out_train = jax.block_until_ready(out_train)
    scaled = ref * (1.0 / (1.0 - rate))
    ok = jnp.all(
        jnp.isclose(out_train, 0.0)
        | jnp.isclose(out_train, scaled, atol=1e-5, rtol=1e-5)
    )
    assert bool(ok), "dropout output must be 0 or scaled (x + pe)"

    print("KERNEL_OK")
</pallas_src>

<mosaic_0001>
module attributes {stable_mosaic.version = 11 : i64} {
  func.func @_pe_add_kernel(%arg0: i32, %arg1: memref<8x64xf32, #tpu.memory_space<vmem>>, %arg2: memref<8x32xf32, #tpu.memory_space<vmem>>, %arg3: memref<8x64xf32, #tpu.memory_space<vmem>>) attributes {dimension_semantics = [#tpu.dimension_semantics<parallel>], iteration_bounds = array<i64: 1>, scalar_prefetch = 0 : i64, scratch_operands = 0 : i64, tpu.core_type = #tpu.core_type<tc>, window_params = [{transform_indices = @transform_0, window_bounds = array<i64: 8, 64>}, {transform_indices = @transform_1, window_bounds = array<i64: 8, 32>}, {transform_indices = @transform_2, window_bounds = array<i64: 8, 64>}]} {
    %c0 = arith.constant 0 : index
    %c0_0 = arith.constant 0 : index
    %0 = vector.load %arg1[%c0, %c0_0] : memref<8x64xf32, #tpu.memory_space<vmem>>, vector<8x64xf32>
    %c0_1 = arith.constant 0 : index
    %c0_2 = arith.constant 0 : index
    %1 = vector.load %arg2[%c0_1, %c0_2] : memref<8x32xf32, #tpu.memory_space<vmem>>, vector<8x32xf32>
    %2 = tpu.concatenate %1, %1 in 1 : vector<8x32xf32>, vector<8x32xf32> -> vector<8x64xf32>
    %3 = arith.addf %0, %2 : vector<8x64xf32>
    %c0_3 = arith.constant 0 : index
    %c0_4 = arith.constant 0 : index
    %4 = vector.load %arg3[%c0_3, %c0_4] : memref<8x64xf32, #tpu.memory_space<vmem>>, vector<8x64xf32>
    tpu.vector_store %arg3[%c0_3, %c0_4], %3 {strides = array<i32>} : memref<8x64xf32, #tpu.memory_space<vmem>>, vector<8x64xf32>,
    return
  }
  func.func @transform_0(%arg0: i32) -> (i32, i32) {
    %c0_i32 = arith.constant 0 : i32
    %c0_i32_0 = arith.constant 0 : i32
    return %arg0, %c0_i32 : i32, i32
  }
  func.func @transform_1(%arg0: i32) -> (i32, i32) {
    %c0_i32 = arith.constant 0 : i32
    %c0_i32_0 = arith.constant 0 : i32
    return %arg0, %c0_i32 : i32, i32
  }
  func.func @transform_2(%arg0: i32) -> (i32, i32) {
    %c0_i32 = arith.constant 0 : i32
    %c0_i32_0 = arith.constant 0 : i32
    return %arg0, %c0_i32 : i32, i32
  }
}

</mosaic_0001>

<llo_original>
// kernel: positional_encoding_forward.1
$region0: #{positional_encoding_forward.1}
  #allocation0 [shape = 'u32[]', space=smem, size = 0x4, offset = 0x4, fixed_abs, tag = 'smem constant byte address 0x4 - core index']
  #allocation1 [shape = 'u32[144,128]{1,0:T(1,128)}', space=vmem, size = 0x12000, scoped, tag = 'internal scratch']
  %s0 = inlined_call_operand.vmem [shape: f32[8,64], index: 0, kind: input, shape index: {}]
  %s1 = inlined_call_operand.vmem [shape: f32[5000,32], index: 1, kind: input, shape index: {}]
  %s2 = inlined_call_operand.vmem [shape: f32[8,64], index: 2, kind: output, shape index: {}]
  %s3 = sld [smem:[#allocation0]]
  $region18: #{positional_encoding_forward.1} parent=0
    _
  %s5 = ssub.s32 1, %s3
  %s6 = scalar_select 0, %s5, %s3
  // Predicated region
  $region2: #{positional_encoding_forward.1} parent=0 // pred_check
    _
  $region3: #{positional_encoding_forward.1} parent=0 // pred_check_branch
    %8 = sbr.rel (0) target = $region5
  $region4: #{positional_encoding_forward.1} parent=0 // pred_region
    _
  $region5: #{positional_encoding_forward.1} parent=0 // pred_fallthru
    _
  // Predicated region
  $region6: #{positional_encoding_forward.1} parent=0 // pred_check
    _
  $region7: #{positional_encoding_forward.1} parent=0 // pred_check_branch
    %10 = sbr.rel (0) target = $region9
  $region8: #{positional_encoding_forward.1} parent=0 // pred_region
    _
  $region9: #{positional_encoding_forward.1} parent=0 // pred_fallthru
    _
  %v11 = vld [vmem:[%s0] sm:$0xff]
  %v12 = vld [vmem:[%s1] sm:$0xff]
  %14 = vrot.lane.b32.xlu0 %v12, 32
  %v15 = vpop.permute.xlu0 %14
  %vm17 = vcmask 261120
  %v18 = vsel %vm17, %v12, %v15
  %v19 = vadd.f32 %v11, %v18
  %vm20 = vcmask 523264
  %21 = vst.msk [vmem:[%s2] sm:$0xff] %vm20, %v19
  // Predicated region
  $region10: #{positional_encoding_forward.1} parent=0 // pred_check
    _
  $region11: #{positional_encoding_forward.1} parent=0 // pred_check_branch
    %23 = sbr.rel (0) target = $region13
  $region12: #{positional_encoding_forward.1} parent=0 // pred_region
    _
  $region13: #{positional_encoding_forward.1} parent=0 // pred_fallthru
    _
  // Predicated region
  $region14: #{positional_encoding_forward.1} parent=0 // pred_check
    _
  $region15: #{positional_encoding_forward.1} parent=0 // pred_check_branch
    %25 = sbr.rel (0) target = $region17
  $region16: #{positional_encoding_forward.1} parent=0 // pred_region
    _
  $region17: #{positional_encoding_forward.1} parent=0 // pred_fallthru
    _

</llo_original>
